<compile_context>
chip_gen: v7x
topology: tpu7x:2x2x1
jax: 0.10.0
libtpu: 0.0.40
codegen_flags: <defaults>
</compile_context>

<pallas_src>
import numpy as np
import jax
import jax.numpy as jnp
from jax import lax
from jax.experimental import pallas as pl
from jax.experimental.pallas import tpu as pltpu


# ----------------------------------------------------------------------------
# Host-side glue: Dicke-state enumeration and partial-trace coefficients
# (dense equivalent of dicke.qudit_dicke_state_partial_trace(dimB, kext)).
# ----------------------------------------------------------------------------
def dicke_klist(dim, kext):
    """All occupation tuples (k_0,...,k_{dim-1}) with sum == kext (lexicographic)."""
    if dim == 1:
        return [(kext,)]
    ret = []
    for k0 in range(kext, -1, -1):
        for rest in dicke_klist(dim - 1, kext - k0):
            ret.append((k0,) + rest)
    return ret


def build_Bij_dense(dimB, kext):
    """B[i,j,k,k'] = sqrt(k_i * k'_j)/kext  if  k - e_i == k' - e_j  else 0."""
    klist = dicke_klist(dimB, kext)
    idx = {k: n for n, k in enumerate(klist)}
    N = len(klist)
    B = np.zeros((dimB, dimB, N, N), dtype=np.float64)
    for i in range(dimB):
        for j in range(dimB):
            for a, k in enumerate(klist):
                if k[i] == 0:
                    continue
                kp = list(k)
                kp[i] -= 1
                kp[j] += 1
                kp = tuple(kp)
                b = idx.get(kp)
                if b is not None:
                    B[i, j, a, b] = np.sqrt(k[i] * kp[j]) / kext
    return klist, B


# ----------------------------------------------------------------------------
# Pallas kernel (one grid step per partial-trace block p = i*dimB + j):
#   normalization + complex bilinear contraction (re/im stacked) + per-block
#   expectation-value partial.
# ----------------------------------------------------------------------------
def pureb_kernel(pq_ref, bhi_ref, blo_ref, w_ref, m_ref, loss_ref):
    pq = pq_ref[...]                                   # (2*dimA, N): [re; im] stacked
    inv = lax.rsqrt(jnp.sum(pq * pq))                  # 1 / ||p||_F
    pq = pq * inv

    # --- stage 1: T = p_n @ B[p], 3-pass bf16 split (== bf16_3x / Precision.HIGH) ---
    pq_hi = pq.astype(jnp.bfloat16)
    pq_lo = (pq - pq_hi.astype(jnp.float32)).astype(jnp.bfloat16)
    bhi = bhi_ref[0]                                   # (N, N) bf16 (hi part of B[p])
    blo = blo_ref[0]                                   # (N, N) bf16 (lo part of B[p])
    T = (jnp.dot(pq_hi, bhi, preferred_element_type=jnp.float32)
         + jnp.dot(pq_hi, blo, preferred_element_type=jnp.float32)
         + jnp.dot(pq_lo, bhi, preferred_element_type=jnp.float32))   # (2*dimA, N)

    # --- stage 2: single stacked matmul  M = T @ p_n^T  (contract last dims) ---
    # M = [[Tr@pr^T, Tr@pi^T], [Ti@pr^T, Ti@pi^T]];  rho_re/rho_im are recombined
    # from M's quadrants in the wrapper (cheap, keeps the kernel store simple).
    dn = (((1,), (1,)), ((), ()))
    M = lax.dot_general(T, pq, dn, preferred_element_type=jnp.float32,
                        precision=lax.Precision.HIGHEST)              # (2dA, 2dA)
    m_ref[0] = M

    # per-block loss partial: Re(Tr(rho_p @ op_p)) == sum(M * W[p]) with W packed on host
    loss = jnp.zeros((1, 1), jnp.float32) + jnp.sum(M * w_ref[0])
    loss_ref[0] = loss


def pureb_forward(pj_real, pj_imag, B_dense, op):
    """Returns (loss, dm) matching PureBosonicExt.forward() (expectation-op path)."""
    dimA, N = pj_real.shape
    dimB = B_dense.shape[0]
    P = dimB * dimB
    D = dimA * dimB
    dA2 = 2 * dimA

    # --- pack B as (P, N, N) and pre-split into bf16 hi/lo halves (host-side) ---
    B_f32 = jnp.asarray(B_dense.reshape(P, N, N), jnp.float32)
    B_hi = B_f32.astype(jnp.bfloat16)
    B_lo = (B_f32 - B_hi.astype(jnp.float32)).astype(jnp.bfloat16)

    # --- pack the expectation-op weights into one real (P, 2dA, 2dA) mask W so that
    #     Re(sum_p rho_p * opw_p) == sum_p sum(M_p * W_p), M_p being the stacked
    #     re/im Gram block computed in-kernel.
    # opw[i*dimB+j, a, a'] = op[a'*dimB + j, a*dimB + i]
    op_np = np.asarray(op)
    op4 = op_np.reshape(dimA, dimB, dimA, dimB)        # [a', j, a, i]
    opw = np.transpose(op4, (3, 1, 2, 0)).reshape(P, dimA, dimA)
    W = np.zeros((P, dA2, dA2), np.float32)
    W[:, :dimA, :dimA] = opw.real                      # multiplies Tr@pr^T
    W[:, dimA:, dimA:] = opw.real                      # multiplies Ti@pi^T
    W[:, dimA:, :dimA] = -opw.imag                     # multiplies Ti@pr^T
    W[:, :dimA, dimA:] = opw.imag                      # multiplies Tr@pi^T

    # --- stack re/im once: (2*dimA, N) fills sublanes that dimA=2 alone would waste ---
    pq = jnp.concatenate([jnp.asarray(pj_real, jnp.float32),
                          jnp.asarray(pj_imag, jnp.float32)], axis=0)

    M_blocks, loss_parts = pl.pallas_call(
        pureb_kernel,
        out_shape=(
            jax.ShapeDtypeStruct((P, dA2, dA2), jnp.float32),
            jax.ShapeDtypeStruct((P, 1, 1), jnp.float32),
        ),
        grid=(P,),
        in_specs=[
            pl.BlockSpec((dA2, N), lambda p: (0, 0)),          # stacked p (resident)
            pl.BlockSpec((1, N, N), lambda p: (p, 0, 0)),      # B hi, streamed per block
            pl.BlockSpec((1, N, N), lambda p: (p, 0, 0)),      # B lo, streamed per block
            pl.BlockSpec((1, dA2, dA2), lambda p: (p, 0, 0)),  # op weight mask
        ],
        out_specs=(
            pl.BlockSpec((1, dA2, dA2), lambda p: (p, 0, 0)),  # Gram block per p
            pl.BlockSpec((1, 1, 1), lambda p: (p, 0, 0)),      # loss partial per p
        ),
        compiler_params=pltpu.CompilerParams(
            dimension_semantics=("parallel",),                 # v7x: split P over 2 TCs
            vmem_limit_bytes=64 * 1024 * 1024,
        ),
    )(pq, B_hi, B_lo, jnp.asarray(W))

    # --- wrapper-side recombination (tiny data) ---
    rr = M_blocks[:, :dimA, :dimA] + M_blocks[:, dimA:, dimA:]
    ri = M_blocks[:, dimA:, :dimA] - M_blocks[:, :dimA, dimA:]
    rho = rr + 1j * ri                                  # (P, dimA, dimA), p = i*dimB+j
    # dm[a*dimB+i, a'*dimB+j] = rho[i*dimB+j, a, a']
    dm = jnp.transpose(rho.reshape(dimB, dimB, dimA, dimA), (2, 0, 3, 1)).reshape(D, D)
    loss = jnp.sum(loss_parts)
    # TODO(synk): quantum_relative_entropy / dm_to_gellmann_basis loss branches need a
    # complex-Hermitian eigendecomposition (matrix log); no Pallas TPU equivalent.
    return loss, dm


if __name__ == "__main__":
    dimA, dimB, kext = 2, 2, 8            # small, matches PureBosonicExt(dimA, dimB, kext)
    klist, B_dense = build_Bij_dense(dimB, kext)
    N = len(klist)                        # 9 Dicke states for (dimB=2, kext=8)
    D = dimA * dimB

    key = jax.random.PRNGKey(0)
    k1, k2, k3, k4 = jax.random.split(key, 4)
    pj_real = jax.random.normal(k1, (dimA, N), jnp.float32)
    pj_imag = jax.random.normal(k2, (dimA, N), jnp.float32)
    nrm = jnp.sqrt(jnp.sum(pj_real ** 2 + pj_imag ** 2))
    pj_real = pj_real / nrm               # __init__ normalization (forward re-normalizes)
    pj_imag = pj_imag / nrm

    # deterministic Hermitian expectation operator (set_expectation_op)
    h = (jax.random.normal(k3, (D, D), jnp.float32)
         + 1j * jax.random.normal(k4, (D, D), jnp.float32))
    op = (h + h.conj().T) / 2

    loss, dm = pureb_forward(pj_real, pj_imag, B_dense, op)
    loss = jax.block_until_ready(loss)
    dm = jax.block_until_ready(dm)

    # reference (plain numpy, float64 complex) for correctness
    p = np.asarray(pj_real, np.float64) + 1j * np.asarray(pj_imag, np.float64)
    p = p / np.linalg.norm(p.reshape(-1))
    dm_ref = np.einsum('ak,ijkl,bl->aibj', p, B_dense, p.conj()).reshape(D, D)
    loss_ref = np.real(np.dot(dm_ref.reshape(-1), np.asarray(op).T.reshape(-1)))

    assert np.allclose(np.asarray(dm), dm_ref, atol=1e-4, rtol=1e-3)
    assert abs(float(loss) - loss_ref) < 1e-4
    assert abs(np.trace(np.asarray(dm)).real - 1.0) < 1e-4   # density matrix sanity

    print("KERNEL_OK")
</pallas_src>

<mosaic_0001>
module attributes {stable_mosaic.version = 11 : i64} {
  func.func @pureb_kernel(%arg0: i32, %arg1: memref<4x9xf32, #tpu.memory_space<vmem>>, %arg2: memref<1x9x9xbf16, #tpu.memory_space<vmem>>, %arg3: memref<1x9x9xbf16, #tpu.memory_space<vmem>>, %arg4: memref<1x4x4xf32, #tpu.memory_space<vmem>>, %arg5: memref<1x4x4xf32, #tpu.memory_space<vmem>>, %arg6: memref<1x1x1xf32, #tpu.memory_space<vmem>>) attributes {dimension_semantics = [#tpu.dimension_semantics<parallel>], iteration_bounds = array<i64: 4>, scalar_prefetch = 0 : i64, scratch_operands = 0 : i64, tpu.core_type = #tpu.core_type<tc>, window_params = [{pipeline_mode = #tpu.pipeline_mode<synchronous>, transform_indices = @transform_0, window_bounds = array<i64: 4, 9>}, {transform_indices = @transform_1, window_bounds = array<i64: 1, 9, 9>}, {transform_indices = @transform_2, window_bounds = array<i64: 1, 9, 9>}, {transform_indices = @transform_3, window_bounds = array<i64: 1, 4, 4>}, {transform_indices = @transform_4, window_bounds = array<i64: 1, 4, 4>}, {transform_indices = @transform_5, window_bounds = array<i64: 1, 1, 1>}]} {
    %c0 = arith.constant 0 : index
    %c0_0 = arith.constant 0 : index
    %0 = vector.load %arg1[%c0, %c0_0] : memref<4x9xf32, #tpu.memory_space<vmem>>, vector<4x9xf32>
    %1 = arith.mulf %0, %0 : vector<4x9xf32>
    %2 = vector.shape_cast %1 : vector<4x9xf32> to vector<1x4x9xf32>
    %cst = arith.constant dense<0.000000e+00> : vector<1xf32>
    %3 = vector.multi_reduction <add>, %2, %cst [1, 2] : vector<1x4x9xf32> to vector<1xf32>
    %4 = vector.shape_cast %3 : vector<1xf32> to vector<1x1x1xf32>
    %5 = vector.extract %4[0, 0, 0] : f32 from vector<1x1x1xf32>
    %6 = math.rsqrt %5 : f32
    %7 = vector.broadcast %6 : f32 to vector<4x9xf32>
    %8 = arith.mulf %0, %7 : vector<4x9xf32>
    %9 = arith.truncf %8 : vector<4x9xf32> to vector<4x9xbf16>
    %10 = arith.extf %9 : vector<4x9xbf16> to vector<4x9xf32>
    %11 = arith.subf %8, %10 : vector<4x9xf32>
    %12 = arith.truncf %11 : vector<4x9xf32> to vector<4x9xbf16>
    %c0_1 = arith.constant 0 : index
    %c0_2 = arith.constant 0 : index
    %c0_3 = arith.constant 0 : index
    %13 = vector.load %arg2[%c0_1, %c0_2, %c0_3] : memref<1x9x9xbf16, #tpu.memory_space<vmem>>, vector<1x9x9xbf16>
    %14 = vector.shape_cast %13 : vector<1x9x9xbf16> to vector<9x9xbf16>
    %c0_4 = arith.constant 0 : index
    %c0_5 = arith.constant 0 : index
    %c0_6 = arith.constant 0 : index
    %15 = vector.load %arg3[%c0_4, %c0_5, %c0_6] : memref<1x9x9xbf16, #tpu.memory_space<vmem>>, vector<1x9x9xbf16>
    %16 = vector.shape_cast %15 : vector<1x9x9xbf16> to vector<9x9xbf16>
    %cst_7 = arith.constant dense<0.000000e+00> : vector<4x9xf32>
    %17 = tpu.matmul %9, %14, %cst_7 {dimension_numbers = #tpu.dot_dimension_numbers<[1], [0], [0], [1], [0, 0, 1, 1], [], []>} : vector<4x9xbf16>, vector<9x9xbf16>, vector<4x9xf32> -> vector<4x9xf32>
    %cst_8 = arith.constant dense<0.000000e+00> : vector<4x9xf32>
    %18 = tpu.matmul %9, %16, %cst_8 {dimension_numbers = #tpu.dot_dimension_numbers<[1], [0], [0], [1], [0, 0, 1, 1], [], []>} : vector<4x9xbf16>, vector<9x9xbf16>, vector<4x9xf32> -> vector<4x9xf32>
    %19 = arith.addf %17, %18 : vector<4x9xf32>
    %cst_9 = arith.constant dense<0.000000e+00> : vector<4x9xf32>
    %20 = tpu.matmul %12, %14, %cst_9 {dimension_numbers = #tpu.dot_dimension_numbers<[1], [0], [0], [1], [0, 0, 1, 1], [], []>} : vector<4x9xbf16>, vector<9x9xbf16>, vector<4x9xf32> -> vector<4x9xf32>
    %21 = arith.addf %19, %20 : vector<4x9xf32>
    %cst_10 = arith.constant dense<0.000000e+00> : vector<4x4xf32>
    %22 = tpu.matmul %21, %8, %cst_10 {dimension_numbers = #tpu.dot_dimension_numbers<[1], [1], [0], [0], [0, 0, 1, 0], [], []>, precision = #tpu.contract_precision<fp32>} : vector<4x9xf32>, vector<4x9xf32>, vector<4x4xf32> -> vector<4x4xf32>
    %c0_11 = arith.constant 0 : index
    %c0_12 = arith.constant 0 : index
    %c0_13 = arith.constant 0 : index
    %23 = vector.load %arg5[%c0_11, %c0_12, %c0_13] : memref<1x4x4xf32, #tpu.memory_space<vmem>>, vector<1x4x4xf32>
    %24 = vector.shape_cast %23 : vector<1x4x4xf32> to vector<4x4xf32>
    %25 = vector.shape_cast %22 : vector<4x4xf32> to vector<1x4x4xf32>
    tpu.vector_store %arg5[%c0_11, %c0_12, %c0_13], %25 {strides = array<i32>} : memref<1x4x4xf32, #tpu.memory_space<vmem>>, vector<1x4x4xf32>,
    %cst_14 = arith.constant 0.000000e+00 : f32
    %26 = vector.broadcast %cst_14 : f32 to vector<1x1xf32>
    %c0_15 = arith.constant 0 : index
    %c0_16 = arith.constant 0 : index
    %c0_17 = arith.constant 0 : index
    %27 = vector.load %arg4[%c0_15, %c0_16, %c0_17] : memref<1x4x4xf32, #tpu.memory_space<vmem>>, vector<1x4x4xf32>
    %28 = vector.shape_cast %27 : vector<1x4x4xf32> to vector<4x4xf32>
    %29 = arith.mulf %22, %28 : vector<4x4xf32>
    %30 = vector.shape_cast %29 : vector<4x4xf32> to vector<1x4x4xf32>
    %cst_18 = arith.constant dense<0.000000e+00> : vector<1xf32>
    %31 = vector.multi_reduction <add>, %30, %cst_18 [1, 2] : vector<1x4x4xf32> to vector<1xf32>
    %32 = vector.shape_cast %31 : vector<1xf32> to vector<1x1x1xf32>
    %33 = vector.extract %32[0, 0, 0] : f32 from vector<1x1x1xf32>
    %34 = vector.broadcast %33 : f32 to vector<1x1xf32>
    %35 = arith.addf %26, %34 : vector<1x1xf32>
    %c0_19 = arith.constant 0 : index
    %c0_20 = arith.constant 0 : index
    %c0_21 = arith.constant 0 : index
    %36 = vector.load %arg6[%c0_19, %c0_20, %c0_21] : memref<1x1x1xf32, #tpu.memory_space<vmem>>, vector<1x1x1xf32>
    %37 = vector.shape_cast %36 : vector<1x1x1xf32> to vector<1x1xf32>
    %38 = vector.shape_cast %35 : vector<1x1xf32> to vector<1x1x1xf32>
    tpu.vector_store %arg6[%c0_19, %c0_20, %c0_21], %38 {strides = array<i32>} : memref<1x1x1xf32, #tpu.memory_space<vmem>>, vector<1x1x1xf32>,
    return
  }
  func.func @transform_0(%arg0: i32) -> (i32, i32) {
    %c0_i32 = arith.constant 0 : i32
    %c0_i32_0 = arith.constant 0 : i32
    %c0_i32_1 = arith.constant 0 : i32
    return %c0_i32, %c0_i32_0 : i32, i32
  }
  func.func @transform_1(%arg0: i32) -> (i32, i32, i32) {
    %c0_i32 = arith.constant 0 : i32
    %c0_i32_0 = arith.constant 0 : i32
    %c0_i32_1 = arith.constant 0 : i32
    return %arg0, %c0_i32, %c0_i32_0 : i32, i32, i32
  }
  func.func @transform_2(%arg0: i32) -> (i32, i32, i32) {
    %c0_i32 = arith.constant 0 : i32
    %c0_i32_0 = arith.constant 0 : i32
    %c0_i32_1 = arith.constant 0 : i32
    return %arg0, %c0_i32, %c0_i32_0 : i32, i32, i32
  }
  func.func @transform_3(%arg0: i32) -> (i32, i32, i32) {
    %c0_i32 = arith.constant 0 : i32
    %c0_i32_0 = arith.constant 0 : i32
    %c0_i32_1 = arith.constant 0 : i32
    return %arg0, %c0_i32, %c0_i32_0 : i32, i32, i32
  }
  func.func @transform_4(%arg0: i32) -> (i32, i32, i32) {
    %c0_i32 = arith.constant 0 : i32
    %c0_i32_0 = arith.constant 0 : i32
    %c0_i32_1 = arith.constant 0 : i32
    return %arg0, %c0_i32, %c0_i32_0 : i32, i32, i32
  }
  func.func @transform_5(%arg0: i32) -> (i32, i32, i32) {
    %c0_i32 = arith.constant 0 : i32
    %c0_i32_0 = arith.constant 0 : i32
    %c0_i32_1 = arith.constant 0 : i32
    return %arg0, %c0_i32, %c0_i32_0 : i32, i32, i32
  }
}

</mosaic_0001>

<llo_original>
// kernel: tpu_custom_call.1
$region0: #{tpu_custom_call.1}
  #allocation0 [shape = 'u32[]', space=smem, size = 0x4, offset = 0x4, fixed_abs, tag = 'smem constant byte address 0x4 - core index']
  #allocation1 [shape = 'u32[144,128]{1,0:T(1,128)}', space=vmem, size = 0x12000, scoped, tag = 'internal scratch']
  %s0 = inlined_call_operand.hbm [shape: f32[4,9], index: 0, kind: input, shape index: {}]
  %s1 = inlined_call_operand.hbm [shape: bf16[4,9,9], index: 1, kind: input, shape index: {}]
  %s2 = inlined_call_operand.hbm [shape: bf16[4,9,9], index: 2, kind: input, shape index: {}]
  %s3 = inlined_call_operand.hbm [shape: f32[4,4,4], index: 3, kind: input, shape index: {}]
  %s4 = inlined_call_operand.hbm [shape: f32[4,4,4], index: 4, kind: output, shape index: {0}]
  %s5 = inlined_call_operand.hbm [shape: f32[4,1,1], index: 5, kind: output, shape index: {1}]
  %6 = xla_tuple %s4, %s5
  %s7 = sld [smem:[#allocation0]]
  $region73: #{tpu_custom_call.1} parent=0
    _
  %s9 = ssub.s32 1, %s7
  %s10 = scalar_select 0, %s9, %s7
  $region1: #{tpu_custom_call.1} parent=0
    #allocation2 [shape = 'u8[2048]{0}', space=vmem, size = 0x800, scoped, tag = 'input window, operand 0, single buffered']
    #allocation3 [shape = 's32[2]{0}', space=sflag, size = 0x8, scoped, tag = 'scoped memory for tpu_custom_call.1']
    #allocation4 [shape = 's32[2]{0}', space=sflag, size = 0x8, scoped, tag = 'scoped memory for tpu_custom_call.1']
    #allocation5 [shape = 'u8[8192]{0}', space=vmem, size = 0x2000, scoped, tag = 'input window, operand 1']
    #allocation6 [shape = 's32[2]{0}', space=sflag, size = 0x8, scoped, tag = 'scoped memory for tpu_custom_call.1']
    #allocation7 [shape = 'u8[8192]{0}', space=vmem, size = 0x2000, scoped, tag = 'input window, operand 2']
    #allocation8 [shape = 'u8[4096]{0}', space=vmem, size = 0x1000, scoped, tag = 'input window, operand 3']
    #allocation9 [shape = 's32[2]{0}', space=sflag, size = 0x8, scoped, tag = 'scoped memory for tpu_custom_call.1']
    #allocation10 [shape = 'u8[4096]{0}', space=vmem, size = 0x1000, scoped, tag = 'output window, operand 0']
    #allocation11 [shape = 'u8[1024]{0}', space=vmem, size = 0x400, scoped, tag = 'output window, operand 1']
    #allocation12 [shape = 's32[2]{0}', space=sflag, size = 0x8, scoped, tag = 'scoped memory for tpu_custom_call.1']
    %11 = vsyncpa [#allocation3], 0
    %12 = vsyncpa [#allocation6], 0
    %s13 = scalar_lea.sflag [#allocation6], 1
    %14 = vsyncpa %s13, 0
    %15 = vsyncpa [#allocation9], 0
    %s16 = scalar_lea.sflag [#allocation9], 1
    %17 = vsyncpa %s16, 0
    %18 = vsyncpa [#allocation4], 0
    %s19 = scalar_lea.sflag [#allocation4], 1
    %20 = vsyncpa %s19, 0
    %21 = vsyncpa [#allocation12], 0
    %s22 = scalar_lea.sflag [#allocation12], 1
    %23 = vsyncpa %s22, 0
    loop: start=0, step=1, limit=6
    $region2: #{tpu_custom_call.1} parent=1 // loop_pre_header
      _
    $region3: #{tpu_custom_call.1} parent=1 // loop_header
      %s25 = sphi 0, %s29
      %p26 = scmp.ge.s32.totalorder %s25, 6
      %s33 = sphi 0, %s33
      %s35 = sphi 0, %s33
      %s36 = sphi 0, %s35
      %s50 = sphi 0, %s36
      %s56 = sphi 0, %s58
      %s59 = sphi 0, %s56
      %s60 = sphi 0, %s59
      %s76 = sphi 0, %s60
      %s82 = sphi 0, %s84
      %s85 = sphi 0, %s82
      %s86 = sphi 0, %s85
      %s102 = sphi 0, %s86
      %s108 = sphi 0, %s110
      %s111 = sphi 0, %s108
      %s112 = sphi 0, %s111
      %s128 = sphi 0, %s112
      %s134 = sphi 0, %s136
      %s137 = sphi 0, %s134
      %s138 = sphi 0, %s137
      %s154 = sphi 0, %s138
      %s160 = sphi 0, %s162
      %s163 = sphi 0, %s160
      %s164 = sphi 0, %s163
      %s180 = sphi 0, %s164
    $region4: #{tpu_custom_call.1} parent=1 // loop_header_branch
      %28 = sbr.rel (%p26) target = $region8
    $region5: #{tpu_custom_call.1} parent=1 // loop_body
      %s30 = ssub.s32 %s25, 1
      %s31 = ssub.s32 %s25, 2
      %s32 = sadd.s32 %s25, 1
      %s34 = sadd.s32 %s33, 1
      %p37 = scmp.eq.s32.totalorder %s25, 3
      %p38 = scmp.ne.s32.totalorder %s33, %s35
      %p39 = scmp.eq.s32.totalorder %s25, 0
      %p40 = por %p38, %p39
      %p41 = scmp.ne.s32.totalorder %s33, %s35
      %p42 = scmp.eq.s32.totalorder %s30, 3
      %p43 = por %p41, %p42
      %p44 = scmp.ne.s32.totalorder %s35, %s36
      %p45 = scmp.eq.s32.totalorder %s30, 0
      %p46 = por %p44, %p45
      %p47 = scmp.ne.s32.totalorder %s35, %s36
      %p48 = scmp.eq.s32.totalorder %s31, 3
      %p49 = por %p47, %p48
      %p51 = scmp.ne.s32.totalorder %s36, %s50
      %p52 = scmp.eq.s32.totalorder %s31, 0
      %p53 = por %p51, %p52
      %s54 = ssub.s32 %s25, %s32
      %p55 = scmp.eq.s32.totalorder %s54, 0
      %s57 = sadd.s32 %s56, 1
      %s58 = scalar_select %p55, %s56, %s57
      %p61 = pneg %p55
      %p62 = scmp.eq.s32.totalorder %s25, 3
      %p63 = por %p61, %p62
      %p64 = scmp.ne.s32.totalorder %s56, %s59
      %p65 = scmp.eq.s32.totalorder %s25, 0
      %p66 = por %p64, %p65
      %p67 = scmp.ne.s32.totalorder %s56, %s59
      %p68 = scmp.eq.s32.totalorder %s30, 3
      %p69 = por %p67, %p68
      %p70 = scmp.ne.s32.totalorder %s59, %s60
      %p71 = scmp.eq.s32.totalorder %s30, 0
      %p72 = por %p70, %p71
      %p73 = scmp.ne.s32.totalorder %s59, %s60
      %p74 = scmp.eq.s32.totalorder %s31, 3
      %p75 = por %p73, %p74
      %p77 = scmp.ne.s32.totalorder %s60, %s76
      %p78 = scmp.eq.s32.totalorder %s31, 0
      %p79 = por %p77, %p78
      %s80 = ssub.s32 %s25, %s32
      %p81 = scmp.eq.s32.totalorder %s80, 0
      %s83 = sadd.s32 %s82, 1
      %s84 = scalar_select %p81, %s82, %s83
      %p87 = pneg %p81
      %p88 = scmp.eq.s32.totalorder %s25, 3
      %p89 = por %p87, %p88
      %p90 = scmp.ne.s32.totalorder %s82, %s85
      %p91 = scmp.eq.s32.totalorder %s25, 0
      %p92 = por %p90, %p91
      %p93 = scmp.ne.s32.totalorder %s82, %s85
      %p94 = scmp.eq.s32.totalorder %s30, 3
      %p95 = por %p93, %p94
      %p96 = scmp.ne.s32.totalorder %s85, %s86
      %p97 = scmp.eq.s32.totalorder %s30, 0
      %p98 = por %p96, %p97
      %p99 = scmp.ne.s32.totalorder %s85, %s86
      %p100 = scmp.eq.s32.totalorder %s31, 3
      %p101 = por %p99, %p100
      %p103 = scmp.ne.s32.totalorder %s86, %s102
      %p104 = scmp.eq.s32.totalorder %s31, 0
      %p105 = por %p103, %p104
      %s106 = ssub.s32 %s25, %s32
      %p107 = scmp.eq.s32.totalorder %s106, 0
      %s109 = sadd.s32 %s108, 1
      %s110 = scalar_select %p107, %s108, %s109
      %p113 = pneg %p107
      %p114 = scmp.eq.s32.totalorder %s25, 3
      %p115 = por %p113, %p114
      %p116 = scmp.ne.s32.totalorder %s108, %s111
      %p117 = scmp.eq.s32.totalorder %s25, 0
      %p118 = por %p116, %p117
      %p119 = scmp.ne.s32.totalorder %s108, %s111
      %p120 = scmp.eq.s32.totalorder %s30, 3
      %p121 = por %p119, %p120
      %p122 = scmp.ne.s32.totalorder %s111, %s112
      %p123 = scmp.eq.s32.totalorder %s30, 0
      %p124 = por %p122, %p123
      %p125 = scmp.ne.s32.totalorder %s111, %s112
      %p126 = scmp.eq.s32.totalorder %s31, 3
      %p127 = por %p125, %p126
      %p129 = scmp.ne.s32.totalorder %s112, %s128
      %p130 = scmp.eq.s32.totalorder %s31, 0
      %p131 = por %p129, %p130
      %s132 = ssub.s32 %s25, %s32
      %p133 = scmp.eq.s32.totalorder %s132, 0
      %s135 = sadd.s32 %s134, 1
      %s136 = scalar_select %p133, %s134, %s135
      %p139 = pneg %p133
      %p140 = scmp.eq.s32.totalorder %s25, 3
      %p141 = por %p139, %p140
      %p142 = scmp.ne.s32.totalorder %s134, %s137
      %p143 = scmp.eq.s32.totalorder %s25, 0
      %p144 = por %p142, %p143
      %p145 = scmp.ne.s32.totalorder %s134, %s137
      %p146 = scmp.eq.s32.totalorder %s30, 3
      %p147 = por %p145, %p146
      %p148 = scmp.ne.s32.totalorder %s137, %s138
      %p149 = scmp.eq.s32.totalorder %s30, 0
      %p150 = por %p148, %p149
      %p151 = scmp.ne.s32.totalorder %s137, %s138
      %p152 = scmp.eq.s32.totalorder %s31, 3
      %p153 = por %p151, %p152
      %p155 = scmp.ne.s32.totalorder %s138, %s154
      %p156 = scmp.eq.s32.totalorder %s31, 0
      %p157 = por %p155, %p156
      %s158 = ssub.s32 %s25, %s32
      %p159 = scmp.eq.s32.totalorder %s158, 0
      %s161 = sadd.s32 %s160, 1
      %s162 = scalar_select %p159, %s160, %s161
      %p165 = pneg %p159
      %p166 = scmp.eq.s32.totalorder %s25, 3
      %p167 = por %p165, %p166
      %p168 = scmp.ne.s32.totalorder %s160, %s163
      %p169 = scmp.eq.s32.totalorder %s25, 0
      %p170 = por %p168, %p169
      %p171 = scmp.ne.s32.totalorder %s160, %s163
      %p172 = scmp.eq.s32.totalorder %s30, 3
      %p173 = por %p171, %p172
      %p174 = scmp.ne.s32.totalorder %s163, %s164
      %p175 = scmp.eq.s32.totalorder %s30, 0
      %p176 = por %p174, %p175
      %p177 = scmp.ne.s32.totalorder %s163, %s164
      %p178 = scmp.eq.s32.totalorder %s31, 3
      %p179 = por %p177, %p178
      %p181 = scmp.ne.s32.totalorder %s164, %s180
      %p182 = scmp.eq.s32.totalorder %s31, 0
      %p183 = por %p181, %p182
      %p184 = scmp.le.s32.totalorder 1, %s25
      %p185 = scmp.lt.s32.totalorder %s25, 5
      %p186 = pnand %p184, %p185
      %p187 = pneg %p186
      // Predicated region
      $region9: #{tpu_custom_call.1} parent=5 // pred_check
        _
      $region10: #{tpu_custom_call.1} parent=5 // pred_check_branch
        %189 = sbr.rel (%p186) target = $region12
      $region11: #{tpu_custom_call.1} parent=5 // pred_region
        %s190 = ssub.s32 %s25, 1
        // Predicated region
        $region13: #{tpu_custom_call.1} parent=11 // pred_check
          %p191 = pneg %p46
        $region14: #{tpu_custom_call.1} parent=11 // pred_check_branch
          %193 = sbr.rel (%p191) target = $region16
        $region15: #{tpu_custom_call.1} parent=11 // pred_region
          %s195 = ssub.s32 64, 64
          %196 = vsyncadd [#allocation3], %s195
          %s198 = sshll.u32 [#allocation2], 4
          %s199 = int_to_ptr.vmem [resolvable:$true] %s198
          %201 = dma.hbm_to_vmem [thread:$0]  %s0, 64, %s199, [#allocation3]
        $region16: #{tpu_custom_call.1} parent=11 // pred_fallthru
          _
      $region12: #{tpu_custom_call.1} parent=5 // pred_fallthru
        _
      %p202 = scmp.lt.s32.totalorder %s25, 4
      // Predicated region
      $region17: #{tpu_custom_call.1} parent=5 // pred_check
        %p203 = pneg %p202
      $region18: #{tpu_custom_call.1} parent=5 // pred_check_branch
        %205 = sbr.rel (%p203) target = $region20
      $region19: #{tpu_custom_call.1} parent=5 // pred_region
        // Predicated region
        $region21: #{tpu_custom_call.1} parent=19 // pred_check
          %p206 = pneg %p66
        $region22: #{tpu_custom_call.1} parent=19 // pred_check_branch
          %208 = sbr.rel (%p206) target = $region24
        $region23: #{tpu_custom_call.1} parent=19 // pred_region
          %s209 = sand.u32 %s25, 1
          %s210 = scalar_lea.sflag [#allocation6], %s209
          %s211 = sand.u32 %s56, 1
          %s212 = smul.addr %s211, 8
          %s213 = scalar_lea.vmem [#allocation5], %s212
          %s215 = ssub.s32 128, 128
          %216 = vsyncadd %s210, %s215
          %s217 = smul.addr %s25, 2
          %s218 = smul.addr %s217, 64
          %s219 = scalar_lea.hbm %s1, %s218
          %s220 = sshll.u32 %s213, 4
          %s221 = int_to_ptr.vmem [resolvable:$true] %s220
          %226 = dma.hbm_to_vmem [thread:$0]  %s219, 128, %s221, %s210, 64, 64, 4
        $region24: #{tpu_custom_call.1} parent=19 // pred_fallthru
          _
        // Predicated region
        $region25: #{tpu_custom_call.1} parent=19 // pred_check
          %p227 = pneg %p92
        $region26: #{tpu_custom_call.1} parent=19 // pred_check_branch
          %229 = sbr.rel (%p227) target = $region28
        $region27: #{tpu_custom_call.1} parent=19 // pred_region
          %s230 = sand.u32 %s25, 1
          %s231 = scalar_lea.sflag [#allocation6], %s230
          %s232 = sand.u32 %s82, 1
          %s233 = smul.addr %s232, 8
          %s234 = scalar_lea.vmem [#allocation7], %s233
          %s236 = ssub.s32 128, 128
          %237 = vsyncadd %s231, %s236
          %s238 = smul.addr %s25, 2
          %s239 = smul.addr %s238, 64
          %s240 = scalar_lea.hbm %s2, %s239
          %s241 = sshll.u32 %s234, 4
          %s242 = int_to_ptr.vmem [resolvable:$true] %s241
          %247 = dma.hbm_to_vmem [thread:$0]  %s240, 128, %s242, %s231, 64, 64, 4
        $region28: #{tpu_custom_call.1} parent=19 // pred_fallthru
          _
        // Predicated region
        $region29: #{tpu_custom_call.1} parent=19 // pred_check
          %p248 = pneg %p118
        $region30: #{tpu_custom_call.1} parent=19 // pred_check_branch
          %250 = sbr.rel (%p248) target = $region32
        $region31: #{tpu_custom_call.1} parent=19 // pred_region
          %s251 = sand.u32 %s108, 1
          %s252 = scalar_lea.sflag [#allocation9], %s251
          %s253 = sand.u32 %s108, 1
          %s254 = smul.addr %s253, 4
          %s255 = scalar_lea.vmem [#allocation8], %s254
          %s257 = ssub.s32 64, 64
          %258 = vsyncadd %s252, %s257
          %s259 = smul.addr %s25, 64
          %s260 = scalar_lea.hbm %s3, %s259
          %s262 = sshll.u32 %s255, 4
          %s263 = int_to_ptr.vmem [resolvable:$true] %s262
          %265 = dma.hbm_to_vmem [thread:$0]  %s260, 64, %s263, %s252
        $region32: #{tpu_custom_call.1} parent=19 // pred_fallthru
          _
      $region20: #{tpu_custom_call.1} parent=5 // pred_fallthru
        _
      %p266 = scmp.le.s32.totalorder 1, %s25
      %p267 = scmp.lt.s32.totalorder %s25, 5
      %p268 = pnand %p266, %p267
      %p269 = pneg %p268
      // Predicated region
      $region33: #{tpu_custom_call.1} parent=5 // pred_check
        _
      $region34: #{tpu_custom_call.1} parent=5 // pred_check_branch
        %271 = sbr.rel (%p268) target = $region36
      $region35: #{tpu_custom_call.1} parent=5 // pred_region
        %s272 = ssub.s32 %s25, 1
        // Predicated region
        $region37: #{tpu_custom_call.1} parent=35 // pred_check
          %p273 = pneg %p46
        $region38: #{tpu_custom_call.1} parent=35 // pred_check_branch
          %275 = sbr.rel (%p273) target = $region40
        $region39: #{tpu_custom_call.1} parent=35 // pred_region
          %276 = dma.done [#allocation3], 64
        $region40: #{tpu_custom_call.1} parent=35 // pred_fallthru
          _
        %s277 = sand.u32 %s30, 1
        %s278 = scalar_lea.sflag [#allocation6], %s277
        %s279 = sand.u32 %s59, 1
        %s280 = smul.addr %s279, 8
        %s281 = scalar_lea.vmem [#allocation5], %s280
        // Predicated region
        $region41: #{tpu_custom_call.1} parent=35 // pred_check
          %p282 = pneg %p72
        $region42: #{tpu_custom_call.1} parent=35 // pred_check_branch
          %284 = sbr.rel (%p282) target = $region44
        $region43: #{tpu_custom_call.1} parent=35 // pred_region
          %285 = dma.done %s278, 128
        $region44: #{tpu_custom_call.1} parent=35 // pred_fallthru
          _
        %s286 = sand.u32 %s30, 1
        %s287 = scalar_lea.sflag [#allocation6], %s286
        %s288 = sand.u32 %s85, 1
        %s289 = smul.addr %s288, 8
        %s290 = scalar_lea.vmem [#allocation7], %s289
        // Predicated region
        $region45: #{tpu_custom_call.1} parent=35 // pred_check
          %p291 = pneg %p98
        $region46: #{tpu_custom_call.1} parent=35 // pred_check_branch
          %293 = sbr.rel (%p291) target = $region48
        $region47: #{tpu_custom_call.1} parent=35 // pred_region
          %294 = dma.done %s287, 128
        $region48: #{tpu_custom_call.1} parent=35 // pred_fallthru
          _
        %s295 = sand.u32 %s111, 1
        %s296 = scalar_lea.sflag [#allocation9], %s295
        %s297 = sand.u32 %s111, 1
        %s298 = smul.addr %s297, 4
        %s299 = scalar_lea.vmem [#allocation8], %s298
        // Predicated region
        $region49: #{tpu_custom_call.1} parent=35 // pred_check
          %p300 = pneg %p124
        $region50: #{tpu_custom_call.1} parent=35 // pred_check_branch
          %302 = sbr.rel (%p300) target = $region52
        $region51: #{tpu_custom_call.1} parent=35 // pred_region
          %303 = dma.done %s296, 64
        $region52: #{tpu_custom_call.1} parent=35 // pred_fallthru
          _
        %p304 = pneg %p46
        %p305 = pneg %p43
        %s306 = sand.u32 %s30, 1
        %s307 = scalar_lea.sflag [#allocation6], %s306
        %s308 = sand.u32 %s59, 1
        %s309 = smul.addr %s308, 8
        %s310 = scalar_lea.vmem [#allocation5], %s309
        %p311 = pneg %p72
        %p312 = pneg %p69
        %s313 = sand.u32 %s30, 1
        %s314 = scalar_lea.sflag [#allocation6], %s313
        %s315 = sand.u32 %s85, 1
        %s316 = smul.addr %s315, 8
        %s317 = scalar_lea.vmem [#allocation7], %s316
        %p318 = pneg %p98
        %p319 = pneg %p95
        %s320 = sand.u32 %s111, 1
        %s321 = scalar_lea.sflag [#allocation9], %s320
        %s322 = sand.u32 %s111, 1
        %s323 = smul.addr %s322, 4
        %s324 = scalar_lea.vmem [#allocation8], %s323
        %p325 = pneg %p124
        %p326 = pneg %p121
        %p327 = pneg %p150
        %p328 = pneg %p147
        %s329 = sand.u32 %s137, 1
        %s330 = scalar_lea.sflag [#allocation4], %s329
        %s331 = sand.u32 %s137, 1
        %s332 = smul.addr %s331, 4
        %s333 = scalar_lea.vmem [#allocation10], %s332
        %p334 = pneg %p176
        %p335 = pneg %p173
        %s336 = sand.u32 %s163, 1
        %s337 = scalar_lea.sflag [#allocation12], %s336
        %s338 = sand.u32 %s163, 1
        %s339 = scalar_lea.vmem [#allocation11], %s338
        %v341 = vld [vmem:[#allocation2] sm:$0xf]
        %v342 = vmul.f32 %v341, %v341
        %vm343 = vcmask 68608
        %v344 = vsel %vm343, %v342, 0.0
        %345 = vadd.xlane.f32.xlu0 %v344
        %v346 = vpop.xlane.xlu0 %345
        %v347 = vrot.slane %v346, 4
        %v348 = vadd.f32 %v346, %v347
        %v349 = vrot.slane %v348, 2
        %v350 = vadd.f32 %v348, %v349
        %v351 = vrot.slane %v350, 1
        %v352 = vadd.f32 %v350, %v351
        %s353 = vtos %v352
        %v354 = vstv %s353
        %v355 = vrsqrt.pop %v354
        %s356 = vtos %v355
        %v357 = vstv %s356
        %v358 = vmul.f32 %v341, %v357
        %v359 = vpack.c.bf16 %v358, %v358
        %v360 = vunpack.c.l.bf16 %v359
        %v361 = vsub.f32 %v358, %v360
        %v362 = vpack.c.bf16 %v361, %v361
        %v363 = vld [vmem:[%s281] sm:$0xf]
        %v364 = vld [vmem:[%s281 + $0x4] sm:$0x1]
        %v365 = vld [vmem:[%s290] sm:$0xf]
        %v366 = vld [vmem:[%s290 + $0x4] sm:$0x1]
        %v369 = vunpack.c.l.b16 %v365
        %v370 = vunpack.c.l.b16 %v366
        %v371 = vpack.c.b16 %v370, %v369
        %vm372 = vcmask 72704
        %v374 = vsel %vm372, %v359, 0
        %vm376 = vcmask 1043456
        %vm377 = vcmask 1044480
        %v378 = vsel %vm376, 4294967295, 65535
        %v379 = vsel %vm377, %v378, 0
        %v381 = vand.u32 %v371, %v379
        %383 = vmatprep.subr.bf16.mxu0 0
        %384 = vmatpush1.bf16.msra.mxu0 %v381
        %385 = vmatprep.subr.bf16.mxu0 0
        %386 = vmatpush1.bf16.msra.mxu0 0
        %387 = vmatprep.subr.bf16.mxu0 0
        %388 = vmatpush1.bf16.msra.mxu0 0
        %389 = vmatprep.subr.bf16.mxu0 0
        %390 = vmatpush1.bf16.msra.mxu0 0
        %391 = vmatprep.subr.bf16.mxu0 0
        %392 = vmatpush1.bf16.msra.mxu0 0
        %393 = vmatprep.subr.bf16.mxu0 0
        %394 = vmatpush1.bf16.msra.mxu0 0
        %395 = vmatprep.subr.bf16.mxu0 0
        %396 = vmatpush1.bf16.msra.mxu0 0
        %397 = vmatprep.subr.bf16.mxu0 0
        %398 = vmatpush1.bf16.msra.mxu0 0
        %399 = vmatprep.subr.bf16.mxu0 0
        %400 = vmatpush1.bf16.msra.mxu0 0
        %401 = vmatprep.subr.bf16.mxu0 0
        %402 = vmatpush1.bf16.msra.mxu0 0
        %403 = vmatprep.subr.bf16.mxu0 0
        %404 = vmatpush1.bf16.msra.mxu0 0
        %405 = vmatprep.subr.bf16.mxu0 0
        %406 = vmatpush1.bf16.msra.mxu0 0
        %407 = vmatprep.subr.bf16.mxu0 0
        %408 = vmatpush1.bf16.msra.mxu0 0
        %409 = vmatprep.subr.bf16.mxu0 0
        %410 = vmatpush1.bf16.msra.mxu0 0
        %411 = vmatprep.subr.bf16.mxu0 0
        %412 = vmatpush1.bf16.msra.mxu0 0
        %413 = vmatprep.subr.bf16.mxu0 0
        %414 = vmatpush1.bf16.msra.mxu0 0
        %415 = vmatprep.mubr.bf16.mxu0 0
        %416 = vmatmul.mubr.bf16.gmra.mrb[0].mxu0 %v374
        %v417 = vpop.f32.mrb[0].mxu0
        %v418 = vadd.f32 0.0, %v417
        %v419 = vpop.f32.mrb[0].mxu0
        %v420 = vpop.f32.mrb[0].mxu0
        %v421 = vpop.f32.mrb[0].mxu0
        %422 = vdwg.mxu0
        %v425 = vunpack.c.l.b16 %v363
        %v426 = vunpack.c.l.b16 %v364
        %v427 = vpack.c.b16 %v426, %v425
        %v429 = vand.u32 %v427, %v379
        %431 = vmatprep.subr.bf16.mxu0 0
        %432 = vmatpush1.bf16.msra.mxu0 %v429
        %433 = vmatprep.subr.bf16.mxu0 0
        %434 = vmatpush1.bf16.msra.mxu0 0
        %435 = vmatprep.subr.bf16.mxu0 0
        %436 = vmatpush1.bf16.msra.mxu0 0
        %437 = vmatprep.subr.bf16.mxu0 0
        %438 = vmatpush1.bf16.msra.mxu0 0
        %439 = vmatprep.subr.bf16.mxu0 0
        %440 = vmatpush1.bf16.msra.mxu0 0
        %441 = vmatprep.subr.bf16.mxu0 0
        %442 = vmatpush1.bf16.msra.mxu0 0
        %443 = vmatprep.subr.bf16.mxu0 0
        %444 = vmatpush1.bf16.msra.mxu0 0
        %445 = vmatprep.subr.bf16.mxu0 0
        %446 = vmatpush1.bf16.msra.mxu0 0
        %447 = vmatprep.subr.bf16.mxu0 0
        %448 = vmatpush1.bf16.msra.mxu0 0
        %449 = vmatprep.subr.bf16.mxu0 0
        %450 = vmatpush1.bf16.msra.mxu0 0
        %451 = vmatprep.subr.bf16.mxu0 0
        %452 = vmatpush1.bf16.msra.mxu0 0
        %453 = vmatprep.subr.bf16.mxu0 0
        %454 = vmatpush1.bf16.msra.mxu0 0
        %455 = vmatprep.subr.bf16.mxu0 0
        %456 = vmatpush1.bf16.msra.mxu0 0
        %457 = vmatprep.subr.bf16.mxu0 0
        %458 = vmatpush1.bf16.msra.mxu0 0
        %459 = vmatprep.subr.bf16.mxu0 0
        %460 = vmatpush1.bf16.msra.mxu0 0
        %461 = vmatprep.subr.bf16.mxu0 0
        %462 = vmatpush1.bf16.msra.mxu0 0
        %463 = vmatprep.mubr.bf16.mxu0 0
        %464 = vmatmul.mubr.bf16.gmra.mrb[0].mxu0 %v374
        %v465 = vpop.f32.mrb[0].mxu0
        %v466 = vadd.f32 %v418, %v465
        %v467 = vpop.f32.mrb[0].mxu0
        %v468 = vpop.f32.mrb[0].mxu0
        %v469 = vpop.f32.mrb[0].mxu0
        %470 = vdwg.mxu0
        %v472 = vsel %vm372, %v362, 0
        %474 = vmatprep.subr.bf16.mxu0 0
        %475 = vmatpush1.bf16.msra.mxu0 %v429
        %476 = vmatprep.subr.bf16.mxu0 0
        %477 = vmatpush1.bf16.msra.mxu0 0
        %478 = vmatprep.subr.bf16.mxu0 0
        %479 = vmatpush1.bf16.msra.mxu0 0
        %480 = vmatprep.subr.bf16.mxu0 0
        %481 = vmatpush1.bf16.msra.mxu0 0
        %482 = vmatprep.subr.bf16.mxu0 0
        %483 = vmatpush1.bf16.msra.mxu0 0
        %484 = vmatprep.subr.bf16.mxu0 0
        %485 = vmatpush1.bf16.msra.mxu0 0
        %486 = vmatprep.subr.bf16.mxu0 0
        %487 = vmatpush1.bf16.msra.mxu0 0
        %488 = vmatprep.subr.bf16.mxu0 0
        %489 = vmatpush1.bf16.msra.mxu0 0
        %490 = vmatprep.subr.bf16.mxu0 0
        %491 = vmatpush1.bf16.msra.mxu0 0
        %492 = vmatprep.subr.bf16.mxu0 0
        %493 = vmatpush1.bf16.msra.mxu0 0
        %494 = vmatprep.subr.bf16.mxu0 0
        %495 = vmatpush1.bf16.msra.mxu0 0
        %496 = vmatprep.subr.bf16.mxu0 0
        %497 = vmatpush1.bf16.msra.mxu0 0
        %498 = vmatprep.subr.bf16.mxu0 0
        %499 = vmatpush1.bf16.msra.mxu0 0
        %500 = vmatprep.subr.bf16.mxu0 0
        %501 = vmatpush1.bf16.msra.mxu0 0
        %502 = vmatprep.subr.bf16.mxu0 0
        %503 = vmatpush1.bf16.msra.mxu0 0
        %504 = vmatprep.subr.bf16.mxu0 0
        %505 = vmatpush1.bf16.msra.mxu0 0
        %506 = vmatprep.mubr.bf16.mxu0 0
        %507 = vmatmul.mubr.bf16.gmra.mrb[0].mxu0 %v472
        %v508 = vpop.f32.mrb[0].mxu0
        %v509 = vadd.f32 0.0, %v508
        %v510 = vpop.f32.mrb[0].mxu0
        %v511 = vpop.f32.mrb[0].mxu0
        %v512 = vpop.f32.mrb[0].mxu0
        %513 = vdwg.mxu0
        %v514 = vadd.f32 %v466, %v509
        %v516 = vsel %vm372, %v514, 0
        %v519 = vsel %vm372, %v358, 0
        %521 = vmatprep.subr.mxu0 0.0
        %v522 = vand.u32 %v519, 4294901760
        %523 = vmatpush1.xpose.msra.mxu0 %v522
        %524 = vmatprep.subr.mxu0 0.0
        %525 = vmatpush1.xpose.msra.mxu0 0.0
        %526 = vmatprep.subr.mxu0 0.0
        %527 = vmatpush1.xpose.msra.mxu0 0.0
        %528 = vmatprep.subr.mxu0 0.0
        %529 = vmatpush1.xpose.msra.mxu0 0.0
        %530 = vmatprep.subr.mxu0 0.0
        %531 = vmatpush1.xpose.msra.mxu0 0.0
        %532 = vmatprep.subr.mxu0 0.0
        %533 = vmatpush1.xpose.msra.mxu0 0.0
        %534 = vmatprep.subr.mxu0 0.0
        %535 = vmatpush1.xpose.msra.mxu0 0.0
        %536 = vmatprep.subr.mxu0 0.0
        %537 = vmatpush1.xpose.msra.mxu0 0.0
        %538 = vmatprep.subr.mxu0 0.0
        %539 = vmatpush1.xpose.msra.mxu0 0.0
        %540 = vmatprep.subr.mxu0 0.0
        %541 = vmatpush1.xpose.msra.mxu0 0.0
        %542 = vmatprep.subr.mxu0 0.0
        %543 = vmatpush1.xpose.msra.mxu0 0.0
        %544 = vmatprep.subr.mxu0 0.0
        %545 = vmatpush1.xpose.msra.mxu0 0.0
        %546 = vmatprep.subr.mxu0 0.0
        %547 = vmatpush1.xpose.msra.mxu0 0.0
        %548 = vmatprep.subr.mxu0 0.0
        %549 = vmatpush1.xpose.msra.mxu0 0.0
        %550 = vmatprep.subr.mxu0 0.0
        %551 = vmatpush1.xpose.msra.mxu0 0.0
        %552 = vmatprep.subr.mxu0 0.0
        %553 = vmatpush1.xpose.msra.mxu0 0.0
        %554 = vmatprep.subr.mxu0 0.0
        %555 = vmatpush1.xpose.msra.mxu0 0.0
        %556 = vmatprep.subr.mxu0 0.0
        %557 = vmatpush1.xpose.msra.mxu0 0.0
        %558 = vmatprep.subr.mxu0 0.0
        %559 = vmatpush1.xpose.msra.mxu0 0.0
        %560 = vmatprep.subr.mxu0 0.0
        %561 = vmatpush1.xpose.msra.mxu0 0.0
        %562 = vmatprep.subr.mxu0 0.0
        %563 = vmatpush1.xpose.msra.mxu0 0.0
        %564 = vmatprep.subr.mxu0 0.0
        %565 = vmatpush1.xpose.msra.mxu0 0.0
        %566 = vmatprep.subr.mxu0 0.0
        %567 = vmatpush1.xpose.msra.mxu0 0.0
        %568 = vmatprep.subr.mxu0 0.0
        %569 = vmatpush1.xpose.msra.mxu0 0.0
        %570 = vmatprep.subr.mxu0 0.0
        %571 = vmatpush1.xpose.msra.mxu0 0.0
        %572 = vmatprep.subr.mxu0 0.0
        %573 = vmatpush1.xpose.msra.mxu0 0.0
        %574 = vmatprep.subr.mxu0 0.0
        %575 = vmatpush1.xpose.msra.mxu0 0.0
        %576 = vmatprep.subr.mxu0 0.0
        %577 = vmatpush1.xpose.msra.mxu0 0.0
        %578 = vmatprep.subr.mxu0 0.0
        %579 = vmatpush1.xpose.msra.mxu0 0.0
        %580 = vmatprep.subr.mxu0 0.0
        %581 = vmatpush1.xpose.msra.mxu0 0.0
        %582 = vmatprep.subr.mxu0 0.0
        %583 = vmatpush1.xpose.msra.mxu0 0.0
        %584 = vmatprep.subr.mxu0 0.0
        %585 = vmatpush1.xpose.msra.mxu0 0.0
        %586 = vmatprep.mubr.f32.mxu0 0.0
        %v587 = vand.u32 %v516, 4294901760
        %v588 = vsub.f32 %v516, %v587
        %v589 = vand.u32 %v588, 4294901760
        %v590 = vsub.f32 %v588, %v589
        %v591 = vand.u32 %v590, 4294901760
        %592 = vmatmul.mubr.f32.gmra.mrb[0].mxu0 %v591
        %v593 = vpop.f32.mrb[0].mxu0
        %v594 = vadd.f32 0.0, %v593
        %v595 = vpop.f32.mrb[0].mxu0
        %596 = vdwg.mxu0
        %597 = vmatprep.subr.mxu0 0.0
        %v598 = vand.u32 %v519, 4294901760
        %v599 = vsub.f32 %v519, %v598
        %v600 = vand.u32 %v599, 4294901760
        %v601 = vsub.f32 %v599, %v600
        %v602 = vand.u32 %v601, 4294901760
        %603 = vmatpush1.xpose.msra.mxu0 %v602
        %604 = vmatprep.subr.mxu0 0.0
        %605 = vmatpush1.xpose.msra.mxu0 0.0
        %606 = vmatprep.subr.mxu0 0.0
        %607 = vmatpush1.xpose.msra.mxu0 0.0
        %608 = vmatprep.subr.mxu0 0.0
        %609 = vmatpush1.xpose.msra.mxu0 0.0
        %610 = vmatprep.subr.mxu0 0.0
        %611 = vmatpush1.xpose.msra.mxu0 0.0
        %612 = vmatprep.subr.mxu0 0.0
        %613 = vmatpush1.xpose.msra.mxu0 0.0
        %614 = vmatprep.subr.mxu0 0.0
        %615 = vmatpush1.xpose.msra.mxu0 0.0
        %616 = vmatprep.subr.mxu0 0.0
        %617 = vmatpush1.xpose.msra.mxu0 0.0
        %618 = vmatprep.subr.mxu0 0.0
        %619 = vmatpush1.xpose.msra.mxu0 0.0
        %620 = vmatprep.subr.mxu0 0.0
        %621 = vmatpush1.xpose.msra.mxu0 0.0
        %622 = vmatprep.subr.mxu0 0.0
        %623 = vmatpush1.xpose.msra.mxu0 0.0
        %624 = vmatprep.subr.mxu0 0.0
        %625 = vmatpush1.xpose.msra.mxu0 0.0
        %626 = vmatprep.subr.mxu0 0.0
        %627 = vmatpush1.xpose.msra.mxu0 0.0
        %628 = vmatprep.subr.mxu0 0.0
        %629 = vmatpush1.xpose.msra.mxu0 0.0
        %630 = vmatprep.subr.mxu0 0.0
        %631 = vmatpush1.xpose.msra.mxu0 0.0
        %632 = vmatprep.subr.mxu0 0.0
        %633 = vmatpush1.xpose.msra.mxu0 0.0
        %634 = vmatprep.subr.mxu0 0.0
        %635 = vmatpush1.xpose.msra.mxu0 0.0
        %636 = vmatprep.subr.mxu0 0.0
        %637 = vmatpush1.xpose.msra.mxu0 0.0
        %638 = vmatprep.subr.mxu0 0.0
        %639 = vmatpush1.xpose.msra.mxu0 0.0
        %640 = vmatprep.subr.mxu0 0.0
        %641 = vmatpush1.xpose.msra.mxu0 0.0
        %642 = vmatprep.subr.mxu0 0.0
        %643 = vmatpush1.xpose.msra.mxu0 0.0
        %644 = vmatprep.subr.mxu0 0.0
        %645 = vmatpush1.xpose.msra.mxu0 0.0
        %646 = vmatprep.subr.mxu0 0.0
        %647 = vmatpush1.xpose.msra.mxu0 0.0
        %648 = vmatprep.subr.mxu0 0.0
        %649 = vmatpush1.xpose.msra.mxu0 0.0
        %650 = vmatprep.subr.mxu0 0.0
        %651 = vmatpush1.xpose.msra.mxu0 0.0
        %652 = vmatprep.subr.mxu0 0.0
        %653 = vmatpush1.xpose.msra.mxu0 0.0
        %654 = vmatprep.subr.mxu0 0.0
        %655 = vmatpush1.xpose.msra.mxu0 0.0
        %656 = vmatprep.subr.mxu0 0.0
        %657 = vmatpush1.xpose.msra.mxu0 0.0
        %658 = vmatprep.subr.mxu0 0.0
        %659 = vmatpush1.xpose.msra.mxu0 0.0
        %660 = vmatprep.subr.mxu0 0.0
        %661 = vmatpush1.xpose.msra.mxu0 0.0
        %662 = vmatprep.subr.mxu0 0.0
        %663 = vmatpush1.xpose.msra.mxu0 0.0
        %664 = vmatprep.subr.mxu0 0.0
        %665 = vmatpush1.xpose.msra.mxu0 0.0
        %666 = vmatprep.mubr.f32.mxu0 0.0
        %v667 = vand.u32 %v516, 4294901760
        %668 = vmatmul.mubr.f32.gmra.mrb[0].mxu0 %v667
        %v669 = vpop.f32.mrb[0].mxu0
        %v670 = vadd.f32 %v594, %v669
        %v671 = vpop.f32.mrb[0].mxu0
        %672 = vdwg.mxu0
        %673 = vmatprep.subr.mxu0 0.0
        %v674 = vand.u32 %v519, 4294901760
        %v675 = vsub.f32 %v519, %v674
        %676 = vmatpush1.xpose.msra.mxu0 %v675
        %677 = vmatprep.subr.mxu0 0.0
        %678 = vmatpush1.xpose.msra.mxu0 0.0
        %679 = vmatprep.subr.mxu0 0.0
        %680 = vmatpush1.xpose.msra.mxu0 0.0
        %681 = vmatprep.subr.mxu0 0.0
        %682 = vmatpush1.xpose.msra.mxu0 0.0
        %683 = vmatprep.subr.mxu0 0.0
        %684 = vmatpush1.xpose.msra.mxu0 0.0
        %685 = vmatprep.subr.mxu0 0.0
        %686 = vmatpush1.xpose.msra.mxu0 0.0
        %687 = vmatprep.subr.mxu0 0.0
        %688 = vmatpush1.xpose.msra.mxu0 0.0
        %689 = vmatprep.subr.mxu0 0.0
        %690 = vmatpush1.xpose.msra.mxu0 0.0
        %691 = vmatprep.subr.mxu0 0.0
        %692 = vmatpush1.xpose.msra.mxu0 0.0
        %693 = vmatprep.subr.mxu0 0.0
        %694 = vmatpush1.xpose.msra.mxu0 0.0
        %695 = vmatprep.subr.mxu0 0.0
        %696 = vmatpush1.xpose.msra.mxu0 0.0
        %697 = vmatprep.subr.mxu0 0.0
        %698 = vmatpush1.xpose.msra.mxu0 0.0
        %699 = vmatprep.subr.mxu0 0.0
        %700 = vmatpush1.xpose.msra.mxu0 0.0
        %701 = vmatprep.subr.mxu0 0.0
        %702 = vmatpush1.xpose.msra.mxu0 0.0
        %703 = vmatprep.subr.mxu0 0.0
        %704 = vmatpush1.xpose.msra.mxu0 0.0
        %705 = vmatprep.subr.mxu0 0.0
        %706 = vmatpush1.xpose.msra.mxu0 0.0
        %707 = vmatprep.subr.mxu0 0.0
        %708 = vmatpush1.xpose.msra.mxu0 0.0
        %709 = vmatprep.subr.mxu0 0.0
        %710 = vmatpush1.xpose.msra.mxu0 0.0
        %711 = vmatprep.subr.mxu0 0.0
        %712 = vmatpush1.xpose.msra.mxu0 0.0
        %713 = vmatprep.subr.mxu0 0.0
        %714 = vmatpush1.xpose.msra.mxu0 0.0
        %715 = vmatprep.subr.mxu0 0.0
        %716 = vmatpush1.xpose.msra.mxu0 0.0
        %717 = vmatprep.subr.mxu0 0.0
        %718 = vmatpush1.xpose.msra.mxu0 0.0
        %719 = vmatprep.subr.mxu0 0.0
        %720 = vmatpush1.xpose.msra.mxu0 0.0
        %721 = vmatprep.subr.mxu0 0.0
        %722 = vmatpush1.xpose.msra.mxu0 0.0
        %723 = vmatprep.subr.mxu0 0.0
        %724 = vmatpush1.xpose.msra.mxu0 0.0
        %725 = vmatprep.subr.mxu0 0.0
        %726 = vmatpush1.xpose.msra.mxu0 0.0
        %727 = vmatprep.subr.mxu0 0.0
        %728 = vmatpush1.xpose.msra.mxu0 0.0
        %729 = vmatprep.subr.mxu0 0.0
        %730 = vmatpush1.xpose.msra.mxu0 0.0
        %731 = vmatprep.subr.mxu0 0.0
        %732 = vmatpush1.xpose.msra.mxu0 0.0
        %733 = vmatprep.subr.mxu0 0.0
        %734 = vmatpush1.xpose.msra.mxu0 0.0
        %735 = vmatprep.subr.mxu0 0.0
        %736 = vmatpush1.xpose.msra.mxu0 0.0
        %737 = vmatprep.subr.mxu0 0.0
        %738 = vmatpush1.xpose.msra.mxu0 0.0
        %739 = vmatprep.mubr.f32.mxu0 0.0
        %v740 = vand.u32 %v516, 4294901760
        %v741 = vsub.f32 %v516, %v740
        %742 = vmatmul.mubr.f32.gmra.mrb[0].mxu0 %v741
        %v743 = vpop.f32.mrb[0].mxu0
        %v744 = vadd.f32 %v670, %v743
        %v745 = vpop.f32.mrb[0].mxu0
        %746 = vdwg.mxu0
        %747 = vmatprep.subr.mxu0 0.0
        %v748 = vand.u32 %v519, 4294901760
        %749 = vmatpush1.xpose.msra.mxu0 %v748
        %750 = vmatprep.subr.mxu0 0.0
        %751 = vmatpush1.xpose.msra.mxu0 0.0
        %752 = vmatprep.subr.mxu0 0.0
        %753 = vmatpush1.xpose.msra.mxu0 0.0
        %754 = vmatprep.subr.mxu0 0.0
        %755 = vmatpush1.xpose.msra.mxu0 0.0
        %756 = vmatprep.subr.mxu0 0.0
        %757 = vmatpush1.xpose.msra.mxu0 0.0
        %758 = vmatprep.subr.mxu0 0.0
        %759 = vmatpush1.xpose.msra.mxu0 0.0
        %760 = vmatprep.subr.mxu0 0.0
        %761 = vmatpush1.xpose.msra.mxu0 0.0
        %762 = vmatprep.subr.mxu0 0.0
        %763 = vmatpush1.xpose.msra.mxu0 0.0
        %764 = vmatprep.subr.mxu0 0.0
        %765 = vmatpush1.xpose.msra.mxu0 0.0
        %766 = vmatprep.subr.mxu0 0.0
        %767 = vmatpush1.xpose.msra.mxu0 0.0
        %768 = vmatprep.subr.mxu0 0.0
        %769 = vmatpush1.xpose.msra.mxu0 0.0
        %770 = vmatprep.subr.mxu0 0.0
        %771 = vmatpush1.xpose.msra.mxu0 0.0
        %772 = vmatprep.subr.mxu0 0.0
        %773 = vmatpush1.xpose.msra.mxu0 0.0
        %774 = vmatprep.subr.mxu0 0.0
        %775 = vmatpush1.xpose.msra.mxu0 0.0
        %776 = vmatprep.subr.mxu0 0.0
        %777 = vmatpush1.xpose.msra.mxu0 0.0
        %778 = vmatprep.subr.mxu0 0.0
        %779 = vmatpush1.xpose.msra.mxu0 0.0
        %780 = vmatprep.subr.mxu0 0.0
        %781 = vmatpush1.xpose.msra.mxu0 0.0
        %782 = vmatprep.subr.mxu0 0.0
        %783 = vmatpush1.xpose.msra.mxu0 0.0
        %784 = vmatprep.subr.mxu0 0.0
        %785 = vmatpush1.xpose.msra.mxu0 0.0
        %786 = vmatprep.subr.mxu0 0.0
        %787 = vmatpush1.xpose.msra.mxu0 0.0
        %788 = vmatprep.subr.mxu0 0.0
        %789 = vmatpush1.xpose.msra.mxu0 0.0
        %790 = vmatprep.subr.mxu0 0.0
        %791 = vmatpush1.xpose.msra.mxu0 0.0
        %792 = vmatprep.subr.mxu0 0.0
        %793 = vmatpush1.xpose.msra.mxu0 0.0
        %794 = vmatprep.subr.mxu0 0.0
        %795 = vmatpush1.xpose.msra.mxu0 0.0
        %796 = vmatprep.subr.mxu0 0.0
        %797 = vmatpush1.xpose.msra.mxu0 0.0
        %798 = vmatprep.subr.mxu0 0.0
        %799 = vmatpush1.xpose.msra.mxu0 0.0
        %800 = vmatprep.subr.mxu0 0.0
        %801 = vmatpush1.xpose.msra.mxu0 0.0
        %802 = vmatprep.subr.mxu0 0.0
        %803 = vmatpush1.xpose.msra.mxu0 0.0
        %804 = vmatprep.subr.mxu0 0.0
        %805 = vmatpush1.xpose.msra.mxu0 0.0
        %806 = vmatprep.subr.mxu0 0.0
        %807 = vmatpush1.xpose.msra.mxu0 0.0
        %808 = vmatprep.subr.mxu0 0.0
        %809 = vmatpush1.xpose.msra.mxu0 0.0
        %810 = vmatprep.subr.mxu0 0.0
        %811 = vmatpush1.xpose.msra.mxu0 0.0
        %812 = vmatprep.mubr.f32.mxu0 0.0
        %v813 = vand.u32 %v516, 4294901760
        %v814 = vsub.f32 %v516, %v813
        %v815 = vand.u32 %v814, 4294901760
        %816 = vmatmul.mubr.f32.gmra.mrb[0].mxu0 %v815
        %v817 = vpop.f32.mrb[0].mxu0
        %v818 = vadd.f32 %v744, %v817
        %v819 = vpop.f32.mrb[0].mxu0
        %820 = vdwg.mxu0
        %821 = vmatprep.subr.mxu0 0.0
        %v822 = vand.u32 %v519, 4294901760
        %v823 = vsub.f32 %v519, %v822
        %v824 = vand.u32 %v823, 4294901760
        %825 = vmatpush1.xpose.msra.mxu0 %v824
        %826 = vmatprep.subr.mxu0 0.0
        %827 = vmatpush1.xpose.msra.mxu0 0.0
        %828 = vmatprep.subr.mxu0 0.0
        %829 = vmatpush1.xpose.msra.mxu0 0.0
        %830 = vmatprep.subr.mxu0 0.0
        %831 = vmatpush1.xpose.msra.mxu0 0.0
        %832 = vmatprep.subr.mxu0 0.0
        %833 = vmatpush1.xpose.msra.mxu0 0.0
        %834 = vmatprep.subr.mxu0 0.0
        %835 = vmatpush1.xpose.msra.mxu0 0.0
        %836 = vmatprep.subr.mxu0 0.0
        %837 = vmatpush1.xpose.msra.mxu0 0.0
        %838 = vmatprep.subr.mxu0 0.0
        %839 = vmatpush1.xpose.msra.mxu0 0.0
        %840 = vmatprep.subr.mxu0 0.0
        %841 = vmatpush1.xpose.msra.mxu0 0.0
        %842 = vmatprep.subr.mxu0 0.0
        %843 = vmatpush1.xpose.msra.mxu0 0.0
        %844 = vmatprep.subr.mxu0 0.0
        %845 = vmatpush1.xpose.msra.mxu0 0.0
        %846 = vmatprep.subr.mxu0 0.0
        %847 = vmatpush1.xpose.msra.mxu0 0.0
        %848 = vmatprep.subr.mxu0 0.0
        %849 = vmatpush1.xpose.msra.mxu0 0.0
        %850 = vmatprep.subr.mxu0 0.0
        %851 = vmatpush1.xpose.msra.mxu0 0.0
        %852 = vmatprep.subr.mxu0 0.0
        %853 = vmatpush1.xpose.msra.mxu0 0.0
        %854 = vmatprep.subr.mxu0 0.0
        %855 = vmatpush1.xpose.msra.mxu0 0.0
        %856 = vmatprep.subr.mxu0 0.0
        %857 = vmatpush1.xpose.msra.mxu0 0.0
        %858 = vmatprep.subr.mxu0 0.0
        %859 = vmatpush1.xpose.msra.mxu0 0.0
        %860 = vmatprep.subr.mxu0 0.0
        %861 = vmatpush1.xpose.msra.mxu0 0.0
        %862 = vmatprep.subr.mxu0 0.0
        %863 = vmatpush1.xpose.msra.mxu0 0.0
        %864 = vmatprep.subr.mxu0 0.0
        %865 = vmatpush1.xpose.msra.mxu0 0.0
        %866 = vmatprep.subr.mxu0 0.0
        %867 = vmatpush1.xpose.msra.mxu0 0.0
        %868 = vmatprep.subr.mxu0 0.0
        %869 = vmatpush1.xpose.msra.mxu0 0.0
        %870 = vmatprep.subr.mxu0 0.0
        %871 = vmatpush1.xpose.msra.mxu0 0.0
        %872 = vmatprep.subr.mxu0 0.0
        %873 = vmatpush1.xpose.msra.mxu0 0.0
        %874 = vmatprep.subr.mxu0 0.0
        %875 = vmatpush1.xpose.msra.mxu0 0.0
        %876 = vmatprep.subr.mxu0 0.0
        %877 = vmatpush1.xpose.msra.mxu0 0.0
        %878 = vmatprep.subr.mxu0 0.0
        %879 = vmatpush1.xpose.msra.mxu0 0.0
        %880 = vmatprep.subr.mxu0 0.0
        %881 = vmatpush1.xpose.msra.mxu0 0.0
        %882 = vmatprep.subr.mxu0 0.0
        %883 = vmatpush1.xpose.msra.mxu0 0.0
        %884 = vmatprep.subr.mxu0 0.0
        %885 = vmatpush1.xpose.msra.mxu0 0.0
        %886 = vmatprep.subr.mxu0 0.0
        %887 = vmatpush1.xpose.msra.mxu0 0.0
        %888 = vmatprep.mubr.f32.mxu0 0.0
        %v889 = vand.u32 %v516, 4294901760
        %890 = vmatmul.mubr.f32.gmra.mrb[0].mxu0 %v889
        %v891 = vpop.f32.mrb[0].mxu0
        %v892 = vadd.f32 %v818, %v891
        %v893 = vpop.f32.mrb[0].mxu0
        %894 = vdwg.mxu0
        %895 = vmatprep.subr.mxu0 0.0
        %v896 = vand.u32 %v519, 4294901760
        %897 = vmatpush1.xpose.msra.mxu0 %v896
        %898 = vmatprep.subr.mxu0 0.0
        %899 = vmatpush1.xpose.msra.mxu0 0.0
        %900 = vmatprep.subr.mxu0 0.0
        %901 = vmatpush1.xpose.msra.mxu0 0.0
        %902 = vmatprep.subr.mxu0 0.0
        %903 = vmatpush1.xpose.msra.mxu0 0.0
        %904 = vmatprep.subr.mxu0 0.0
        %905 = vmatpush1.xpose.msra.mxu0 0.0
        %906 = vmatprep.subr.mxu0 0.0
        %907 = vmatpush1.xpose.msra.mxu0 0.0
        %908 = vmatprep.subr.mxu0 0.0
        %909 = vmatpush1.xpose.msra.mxu0 0.0
        %910 = vmatprep.subr.mxu0 0.0
        %911 = vmatpush1.xpose.msra.mxu0 0.0
        %912 = vmatprep.subr.mxu0 0.0
        %913 = vmatpush1.xpose.msra.mxu0 0.0
        %914 = vmatprep.subr.mxu0 0.0
        %915 = vmatpush1.xpose.msra.mxu0 0.0
        %916 = vmatprep.subr.mxu0 0.0
        %917 = vmatpush1.xpose.msra.mxu0 0.0
        %918 = vmatprep.subr.mxu0 0.0
        %919 = vmatpush1.xpose.msra.mxu0 0.0
        %920 = vmatprep.subr.mxu0 0.0
        %921 = vmatpush1.xpose.msra.mxu0 0.0
        %922 = vmatprep.subr.mxu0 0.0
        %923 = vmatpush1.xpose.msra.mxu0 0.0
        %924 = vmatprep.subr.mxu0 0.0
        %925 = vmatpush1.xpose.msra.mxu0 0.0
        %926 = vmatprep.subr.mxu0 0.0
        %927 = vmatpush1.xpose.msra.mxu0 0.0
        %928 = vmatprep.subr.mxu0 0.0
        %929 = vmatpush1.xpose.msra.mxu0 0.0
        %930 = vmatprep.subr.mxu0 0.0
        %931 = vmatpush1.xpose.msra.mxu0 0.0
        %932 = vmatprep.subr.mxu0 0.0
        %933 = vmatpush1.xpose.msra.mxu0 0.0
        %934 = vmatprep.subr.mxu0 0.0
        %935 = vmatpush1.xpose.msra.mxu0 0.0
        %936 = vmatprep.subr.mxu0 0.0
        %937 = vmatpush1.xpose.msra.mxu0 0.0
        %938 = vmatprep.subr.mxu0 0.0
        %939 = vmatpush1.xpose.msra.mxu0 0.0
        %940 = vmatprep.subr.mxu0 0.0
        %941 = vmatpush1.xpose.msra.mxu0 0.0
        %942 = vmatprep.subr.mxu0 0.0
        %943 = vmatpush1.xpose.msra.mxu0 0.0
        %944 = vmatprep.subr.mxu0 0.0
        %945 = vmatpush1.xpose.msra.mxu0 0.0
        %946 = vmatprep.subr.mxu0 0.0
        %947 = vmatpush1.xpose.msra.mxu0 0.0
        %948 = vmatprep.subr.mxu0 0.0
        %949 = vmatpush1.xpose.msra.mxu0 0.0
        %950 = vmatprep.subr.mxu0 0.0
        %951 = vmatpush1.xpose.msra.mxu0 0.0
        %952 = vmatprep.subr.mxu0 0.0
        %953 = vmatpush1.xpose.msra.mxu0 0.0
        %954 = vmatprep.subr.mxu0 0.0
        %955 = vmatpush1.xpose.msra.mxu0 0.0
        %956 = vmatprep.subr.mxu0 0.0
        %957 = vmatpush1.xpose.msra.mxu0 0.0
        %958 = vmatprep.subr.mxu0 0.0
        %959 = vmatpush1.xpose.msra.mxu0 0.0
        %960 = vmatprep.mubr.f32.mxu0 0.0
        %v961 = vand.u32 %v516, 4294901760
        %962 = vmatmul.mubr.f32.gmra.mrb[0].mxu0 %v961
        %v963 = vpop.f32.mrb[0].mxu0
        %v964 = vadd.f32 %v892, %v963
        %v965 = vpop.f32.mrb[0].mxu0
        %966 = vdwg.mxu0
        %vm967 = vcmask 27648
        %968 = vst.msk [vmem:[%s333] sm:$0xf] %vm967, %v964
        %v969 = vld [vmem:[%s299] sm:$0xf]
        %v970 = vmul.f32 %v964, %v969
        %v971 = vsel %vm967, %v970, 0.0
        %972 = vadd.xlane.f32.xlu0 %v971
        %v973 = vpop.xlane.xlu0 %972
        %v974 = vrot.slane %v973, 4
        %v975 = vadd.f32 %v973, %v974
        %v976 = vrot.slane %v975, 2
        %v977 = vadd.f32 %v975, %v976
        %v978 = vrot.slane %v977, 1
        %v979 = vadd.f32 %v977, %v978
        %s980 = vtos %v979
        %v981 = vstv %s980
        %v982 = vadd.f32 %v981, 0.0
        %vm983 = vcmask 0
        %984 = vst.msk [vmem:[%s339] sm:$0x1] %vm983, %v982
        %s985 = sand.u32 %s137, 1
        %s986 = scalar_lea.sflag [#allocation4], %s985
        %s987 = sand.u32 %s137, 1
        %s988 = smul.addr %s987, 4
        %s989 = scalar_lea.vmem [#allocation10], %s988
        %s990 = sand.u32 %s163, 1
        %s991 = scalar_lea.sflag [#allocation12], %s990
        %s992 = sand.u32 %s163, 1
        %s993 = scalar_lea.vmem [#allocation11], %s992
        // Predicated region
        $region53: #{tpu_custom_call.1} parent=35 // pred_check
          %p994 = pneg %p147
        $region54: #{tpu_custom_call.1} parent=35 // pred_check_branch
          %996 = sbr.rel (%p994) target = $region56
        $region55: #{tpu_custom_call.1} parent=35 // pred_region
          %s998 = ssub.s32 64, 64
          %999 = vsyncadd %s986, %s998
          %s1000 = smul.addr %s30, 64
          %s1001 = scalar_lea.hbm %s4, %s1000
          %s1003 = sshll.u32 %s989, 4
          %s1004 = int_to_ptr.vmem [resolvable:$true] %s1003
          %1006 = dma.vmem_to_hbm [thread:$0]  %s1004, 64, %s1001, %s986
        $region56: #{tpu_custom_call.1} parent=35 // pred_fallthru
          _
        // Predicated region
        $region57: #{tpu_custom_call.1} parent=35 // pred_check
          %p1007 = pneg %p173
        $region58: #{tpu_custom_call.1} parent=35 // pred_check_branch
          %1009 = sbr.rel (%p1007) target = $region60
        $region59: #{tpu_custom_call.1} parent=35 // pred_region
          %s1011 = ssub.s32 16, 16
          %1012 = vsyncadd %s991, %s1011
          %s1013 = smul.addr %s30, 16
          %s1014 = scalar_lea.hbm %s5, %s1013
          %s1016 = sshll.u32 %s993, 4
          %s1017 = int_to_ptr.vmem [resolvable:$true] %s1016
          %1019 = dma.vmem_to_hbm [thread:$0]  %s1017, 16, %s1014, %s991
        $region60: #{tpu_custom_call.1} parent=35 // pred_fallthru
          _
      $region36: #{tpu_custom_call.1} parent=5 // pred_fallthru
        _
      %p1020 = scmp.le.s32.totalorder 2, %s25
      // Predicated region
      $region61: #{tpu_custom_call.1} parent=5 // pred_check
        %p1021 = pneg %p1020
      $region62: #{tpu_custom_call.1} parent=5 // pred_check_branch
        %1023 = sbr.rel (%p1021) target = $region64
      $region63: #{tpu_custom_call.1} parent=5 // pred_region
        %s1024 = ssub.s32 %s25, 2
        // Predicated region
        $region65: #{tpu_custom_call.1} parent=63 // pred_check
          %p1025 = pneg %p153
        $region66: #{tpu_custom_call.1} parent=63 // pred_check_branch
          %1027 = sbr.rel (%p1025) target = $region68
        $region67: #{tpu_custom_call.1} parent=63 // pred_region
          %s1028 = sand.u32 %s138, 1
          %s1029 = scalar_lea.sflag [#allocation4], %s1028
          %s1030 = sand.u32 %s138, 1
          %s1031 = smul.addr %s1030, 4
          %s1032 = scalar_lea.vmem [#allocation10], %s1031
          %1033 = dma.done %s1029, 64
        $region68: #{tpu_custom_call.1} parent=63 // pred_fallthru
          _
        // Predicated region
        $region69: #{tpu_custom_call.1} parent=63 // pred_check
          %p1034 = pneg %p179
        $region70: #{tpu_custom_call.1} parent=63 // pred_check_branch
          %1036 = sbr.rel (%p1034) target = $region72
        $region71: #{tpu_custom_call.1} parent=63 // pred_region
          %s1037 = sand.u32 %s164, 1
          %s1038 = scalar_lea.sflag [#allocation12], %s1037
          %s1039 = sand.u32 %s164, 1
          %s1040 = scalar_lea.vmem [#allocation11], %s1039
          %1041 = dma.done %s1038, 16
        $region72: #{tpu_custom_call.1} parent=63 // pred_fallthru
          _
      $region64: #{tpu_custom_call.1} parent=5 // pred_fallthru
        _
    $region6: #{tpu_custom_call.1} parent=1 // loop_footer
      %s29 = sadd.s32 1, %s25
    $region7: #{tpu_custom_call.1} parent=1 // loop_footer_branch
      %24 = sbr.rel target = $region3
    $region8: #{tpu_custom_call.1} parent=1 // loop_exit
      _
    %1042 = vsyncpa [#allocation3], 1
    %s1043 = scalar_lea.sflag [#allocation3], 1
    %1044 = vsyncpa %s1043, 1
    %1045 = vsyncpa [#allocation6], 1
    %s1046 = scalar_lea.sflag [#allocation6], 1
    %1047 = vsyncpa %s1046, 1
    %1048 = vsyncpa [#allocation9], 1
    %s1049 = scalar_lea.sflag [#allocation9], 1
    %1050 = vsyncpa %s1049, 1
    %1051 = vsyncpa [#allocation4], 1
    %s1052 = scalar_lea.sflag [#allocation4], 1
    %1053 = vsyncpa %s1052, 1
    %1054 = vsyncpa [#allocation12], 1
    %s1055 = scalar_lea.sflag [#allocation12], 1
    %1056 = vsyncpa %s1055, 1

</llo_original>
